<compile_context>
chip_gen: v6e
topology: v6e:2x2x1
jax: 0.10.0
libtpu: 0.0.40
codegen_flags: <defaults>
</compile_context>

<pallas_src>
import jax
import jax.numpy as jnp
from jax.experimental import pallas as pl
from jax.experimental.pallas import tpu as pltpu


# ---------------------------------------------------------------------------
# VMEM budgeting (generation aware)
# ---------------------------------------------------------------------------

def _vmem_limits():
    """Returns (vmem_limit_bytes for CompilerParams, byte budget for tiles)."""
    cap = None
    try:
        cap = pltpu.get_tpu_info().vmem_capacity_bytes
    except Exception:
        cap = None
    if not cap:
        cap = 64 * 1024 * 1024            # conservative: v7x per-TensorCore VMEM
    limit = min(int(cap * 0.85), 100 * 1024 * 1024)   # ~100MiB v5e/v6e, ~54MiB v7x
    budget = int(limit * 0.7)             # headroom for Mosaic internal scratch
    return limit, budget


def _round_down8(n):
    return max(8, (int(n) // 8) * 8)


def _pick_tb_flat(B, K, C, budget):
    """Largest batch tile fitting the VMEM budget for the flattened path."""
    fixed = 2 * K * C * 4 + 2 * C * 4              # resident weight + bias (dbl-buffered)
    per_row = 2 * K * 4 + 2 * C * 4                # x tile + out tile (dbl-buffered)
    tb = max(8, (budget - fixed) // per_row)
    if tb >= B:
        tb = B
    else:
        tb = _round_down8(min(tb, B))
    # Keep >= 2 grid steps on big batches so the "parallel" axis spans both
    # TensorCores on v7x (harmless elsewhere: the grid is just a loop).
    if B >= 16 and pl.cdiv(B, tb) < 2:
        tb = _round_down8(B // 2)
    return int(tb)


# ---------------------------------------------------------------------------
# Kernels
# ---------------------------------------------------------------------------

def _ale_flat_kernel(x_ref, w_ref, b_ref, out_ref):
    # x_ref: (tb, S*D)   w_ref: (S*D, C)   b_ref: (1, C)   out_ref: (tb, C)
    # The S-sum is folded into the MXU contraction (weight tiled along S).
    logits = jnp.dot(x_ref[...], w_ref[...],
                     preferred_element_type=jnp.float32) + b_ref[...]
    m = jnp.max(logits, axis=1, keepdims=True)
    e = jnp.exp(logits - m)
    out_ref[...] = (e / jnp.sum(e, axis=1, keepdims=True)).astype(out_ref.dtype)


def _ale_seqsum_kernel(x_ref, w_ref, b_ref, out_ref, xs_acc):
    # x_ref: (tb, ts, D)  w_ref: (D, C)  b_ref: (1, C)  out_ref: (tb, C)
    # xs_acc: (tb, D) f32 scratch accumulating the sequence sum across the
    # "arbitrary" S grid axis -> bounded VMEM/vreg footprint per step.
    s = pl.program_id(1)

    @pl.when(s == 0)
    def _():
        xs_acc[...] = jnp.zeros_like(xs_acc)

    xs_acc[...] += jnp.sum(x_ref[...], axis=1)

    @pl.when(s == pl.num_programs(1) - 1)
    def _():
        logits = jnp.dot(xs_acc[...], w_ref[...],
                         preferred_element_type=jnp.float32) + b_ref[...]
        m = jnp.max(logits, axis=1, keepdims=True)
        e = jnp.exp(logits - m)
        out_ref[...] = (e / jnp.sum(e, axis=1, keepdims=True)).astype(out_ref.dtype)


# ---------------------------------------------------------------------------
# Wrapper
# ---------------------------------------------------------------------------

def fuse_params(w, b, attribute, seq_len):
    """Fold mean + Linear + attribute projection into (D, C) weight, (1, C) bias.

    softmax((mean_S(x) @ W.T + b) @ attr)
      == softmax(sum_S(x) @ [(W.T @ attr)/S] + b @ attr)

    Parameter-only work: hoist out of the hot loop (recompute once per weight
    update, or keep inside the surrounding jit so XLA constant-folds it).
    Done at HIGHEST precision so it introduces no bf16 drift.
    """
    hi = jax.lax.Precision.HIGHEST
    attr = attribute.astype(jnp.float32)
    w_fused = jnp.dot(w.astype(jnp.float32).T, attr, precision=hi) * (1.0 / seq_len)
    b_fused = jnp.dot(b.astype(jnp.float32)[None, :], attr, precision=hi)
    return w_fused, b_fused


def layer_ale_apply(x, w_fused, b_fused, *, block_b=None):
    """x: (B, S, D), w_fused: (D, C), b_fused: (1, C) -> softmax probs (B, C)."""
    B, S, D = x.shape
    Dw, C = w_fused.shape
    assert Dw == D
    vmem_limit, budget = _vmem_limits()

    # Lane-dense path: fold the S-sum into the MXU when D is lane-sparse and
    # the S-tiled weight stays small.
    use_flat = (D < 128) and (S * D * C * 4 <= 4 * 1024 * 1024)

    cost = pl.CostEstimate(
        flops=int(2 * B * S * D * C) if use_flat else int(2 * B * (S * D + D * C)),
        transcendentals=int(B * C),
        bytes_accessed=int((B * S * D + S * D * C + C + B * C) * 4),
    )

    if use_flat:
        K = S * D
        x_flat = x.reshape(B, K)                 # contiguous merge of last 2 dims: free
        w_big = jnp.tile(w_fused, (S, 1))        # (S*D, C); w_big[s*D+d, c] == w_fused[d, c]
        tb = block_b if block_b is not None else _pick_tb_flat(B, K, C, budget)
        grid = (pl.cdiv(B, tb),)
        return pl.pallas_call(
            _ale_flat_kernel,
            out_shape=jax.ShapeDtypeStruct((B, C), jnp.float32),
            grid=grid,
            in_specs=[
                pl.BlockSpec((tb, K), lambda i: (i, 0)),   # stream x over batch tiles
                pl.BlockSpec((K, C), lambda i: (0, 0)),    # resident fused weight
                pl.BlockSpec((1, C), lambda i: (0, 0)),    # resident fused bias
            ],
            out_specs=pl.BlockSpec((tb, C), lambda i: (i, 0)),
            compiler_params=pltpu.CompilerParams(
                dimension_semantics=("parallel",),
                vmem_limit_bytes=vmem_limit,
            ),
            cost_estimate=cost,
        )(x_flat, w_big, b_fused)

    # ---- General fallback: tile S in the grid as a reduction axis ----------
    ts = S
    for cand in (1024, 512, 256, 128, 64, 32, 16, 8):
        if S % cand == 0:                         # must divide S exactly (no masking)
            ts = cand
            break
    fixed = 2 * D * C * 4 + 2 * C * 4
    per_row = 2 * ts * D * 4 + 2 * C * 4 + D * 4  # x + out (dbl-buffered) + scratch
    tb = block_b if block_b is not None else min(B, _round_down8((budget - fixed) // per_row))
    if tb >= B:
        tb = B
    if B >= 16 and pl.cdiv(B, tb) < 2:
        tb = _round_down8(B // 2)
    grid = (pl.cdiv(B, tb), S // ts)
    return pl.pallas_call(
        _ale_seqsum_kernel,
        out_shape=jax.ShapeDtypeStruct((B, C), jnp.float32),
        grid=grid,
        in_specs=[
            pl.BlockSpec((tb, ts, D), lambda i, s: (i, s, 0)),
            pl.BlockSpec((D, C), lambda i, s: (0, 0)),
            pl.BlockSpec((1, C), lambda i, s: (0, 0)),
        ],
        out_specs=pl.BlockSpec((tb, C), lambda i, s: (i, 0)),
        scratch_shapes=[pltpu.VMEM((tb, D), jnp.float32)],
        compiler_params=pltpu.CompilerParams(
            dimension_semantics=("parallel", "arbitrary"),
            vmem_limit_bytes=vmem_limit,
        ),
        cost_estimate=cost,
    )(x, w_fused, b_fused)


def layer_ale_forward(x, w, b, attribute, *, block_b=None):
    """Full equivalent of LAYER_ALE.forward(x, attribute) with fc = (w, b)."""
    w_fused, b_fused = fuse_params(w, b, attribute, x.shape[1])
    return layer_ale_apply(x, w_fused, b_fused, block_b=block_b)


# ---------------------------------------------------------------------------
# Self-test
# ---------------------------------------------------------------------------

if __name__ == "__main__":
    # Small shapes consistent with the module's forward.
    B, S, D, A, C = 2, 8, 32, 16, 10   # batch, seq, input_dim, attri_dim, num_classes

    key = jax.random.PRNGKey(0)
    kx, kattr, kw, kb = jax.random.split(key, 4)

    x = jax.random.normal(kx, (B, S, D), dtype=jnp.float32)
    attribute = jax.random.normal(kattr, (A, C), dtype=jnp.float32)

    # Deterministic parameter init (shapes match nn.Linear(D, A)).
    bound = 1.0 / jnp.sqrt(D)
    w = jax.random.uniform(kw, (A, D), minval=-bound, maxval=bound, dtype=jnp.float32)
    b = jax.random.uniform(kb, (A,), minval=-bound, maxval=bound, dtype=jnp.float32)

    out = jax.block_until_ready(layer_ale_forward(x, w, b, attribute))

    # Pure-JAX reference with the original (unfused) op order at full f32
    # precision, so the only remaining discrepancy is the kernel's own matmul.
    hi = jax.lax.Precision.HIGHEST
    xm = jnp.mean(x, axis=1)
    middle = jnp.dot(xm, w.T, precision=hi) + b
    ref = jax.nn.softmax(jnp.dot(middle, attribute, precision=hi), axis=1)

    assert out.shape == (B, C)
    # 2e-3 absorbs possible bf16-pass MXU drift of the single in-kernel matmul
    # while still catching any real bug (a wrong kernel is off by >> 1e-1).
    assert jnp.allclose(out, ref, atol=2e-3, rtol=2e-3), float(jnp.max(jnp.abs(out - ref)))
    print("KERNEL_OK")
</pallas_src>

<mosaic_0001>
module attributes {stable_mosaic.version = 11 : i64} {
  func.func @_ale_flat_kernel(%arg0: i32, %arg1: memref<2x256xf32, #tpu.memory_space<vmem>>, %arg2: memref<256x10xf32, #tpu.memory_space<vmem>>, %arg3: memref<1x10xf32, #tpu.memory_space<vmem>>, %arg4: memref<2x10xf32, #tpu.memory_space<vmem>>) attributes {dimension_semantics = [#tpu.dimension_semantics<parallel>], iteration_bounds = array<i64: 1>, scalar_prefetch = 0 : i64, scratch_operands = 0 : i64, tpu.core_type = #tpu.core_type<tc>, window_params = [{transform_indices = @transform_0, window_bounds = array<i64: 2, 256>}, {pipeline_mode = #tpu.pipeline_mode<synchronous>, transform_indices = @transform_1, window_bounds = array<i64: 256, 10>}, {pipeline_mode = #tpu.pipeline_mode<synchronous>, transform_indices = @transform_2, window_bounds = array<i64: 1, 10>}, {transform_indices = @transform_3, window_bounds = array<i64: 2, 10>}]} {
    %c0 = arith.constant 0 : index
    %c0_0 = arith.constant 0 : index
    %0 = vector.load %arg1[%c0, %c0_0] : memref<2x256xf32, #tpu.memory_space<vmem>>, vector<2x256xf32>
    %c0_1 = arith.constant 0 : index
    %c0_2 = arith.constant 0 : index
    %1 = vector.load %arg2[%c0_1, %c0_2] : memref<256x10xf32, #tpu.memory_space<vmem>>, vector<256x10xf32>
    %cst = arith.constant dense<0.000000e+00> : vector<2x10xf32>
    %2 = tpu.matmul %0, %1, %cst {dimension_numbers = #tpu.dot_dimension_numbers<[1], [0], [0], [1], [0, 0, 1, 1], [], []>} : vector<2x256xf32>, vector<256x10xf32>, vector<2x10xf32> -> vector<2x10xf32>
    %c0_3 = arith.constant 0 : index
    %c0_4 = arith.constant 0 : index
    %3 = vector.load %arg3[%c0_3, %c0_4] : memref<1x10xf32, #tpu.memory_space<vmem>>, vector<1x10xf32>
    %4 = vector.broadcast %3 : vector<1x10xf32> to vector<2x10xf32>
    %5 = arith.addf %2, %4 : vector<2x10xf32>
    %cst_5 = arith.constant dense<0xFF800000> : vector<2xf32>
    %6 = vector.multi_reduction <maximumf>, %5, %cst_5 [1] : vector<2x10xf32> to vector<2xf32>
    %7 = vector.shape_cast %6 : vector<2xf32> to vector<2x1xf32>
    %8 = vector.broadcast %7 : vector<2x1xf32> to vector<2x10xf32>
    %9 = arith.subf %5, %8 : vector<2x10xf32>
    %10 = math.exp %9 : vector<2x10xf32>
    %cst_6 = arith.constant dense<0.000000e+00> : vector<2xf32>
    %11 = vector.multi_reduction <add>, %10, %cst_6 [1] : vector<2x10xf32> to vector<2xf32>
    %12 = vector.shape_cast %11 : vector<2xf32> to vector<2x1xf32>
    %13 = vector.broadcast %12 : vector<2x1xf32> to vector<2x10xf32>
    %14 = arith.divf %10, %13 : vector<2x10xf32>
    %c0_7 = arith.constant 0 : index
    %c0_8 = arith.constant 0 : index
    %15 = vector.load %arg4[%c0_7, %c0_8] : memref<2x10xf32, #tpu.memory_space<vmem>>, vector<2x10xf32>
    tpu.vector_store %arg4[%c0_7, %c0_8], %14 {strides = array<i32>} : memref<2x10xf32, #tpu.memory_space<vmem>>, vector<2x10xf32>,
    return
  }
  func.func @transform_0(%arg0: i32) -> (i32, i32) {
    %c0_i32 = arith.constant 0 : i32
    %c0_i32_0 = arith.constant 0 : i32
    return %arg0, %c0_i32 : i32, i32
  }
  func.func @transform_1(%arg0: i32) -> (i32, i32) {
    %c0_i32 = arith.constant 0 : i32
    %c0_i32_0 = arith.constant 0 : i32
    %c0_i32_1 = arith.constant 0 : i32
    return %c0_i32, %c0_i32_0 : i32, i32
  }
  func.func @transform_2(%arg0: i32) -> (i32, i32) {
    %c0_i32 = arith.constant 0 : i32
    %c0_i32_0 = arith.constant 0 : i32
    %c0_i32_1 = arith.constant 0 : i32
    return %c0_i32, %c0_i32_0 : i32, i32
  }
  func.func @transform_3(%arg0: i32) -> (i32, i32) {
    %c0_i32 = arith.constant 0 : i32
    %c0_i32_0 = arith.constant 0 : i32
    return %arg0, %c0_i32 : i32, i32
  }
}

</mosaic_0001>

<llo_original>
// kernel: tpu_custom_call.1
$region0: #{tpu_custom_call.1}
  #allocation0 [shape = 'u32[]', space=smem, size = 0x4, offset = 0x4, fixed_abs, tag = 'smem constant byte address 0x4 - core index']
  #allocation1 [shape = 'u32[144,128]{1,0:T(1,128)}', space=vmem, size = 0x12000, scoped, tag = 'internal scratch']
  %s0 = inlined_call_operand.vmem [shape: f32[2,256], index: 0, kind: input, shape index: {}]
  %s1 = inlined_call_operand.vmem [shape: f32[256,10], index: 1, kind: input, shape index: {}]
  %s2 = inlined_call_operand.vmem [shape: f32[1,10], index: 2, kind: input, shape index: {}]
  %s3 = inlined_call_operand.hbm [shape: f32[2,10], index: 3, kind: output, shape index: {}]
  %s4 = sld [smem:[#allocation0]]
  $region22: #{tpu_custom_call.1} parent=0
    _
  %s6 = ssub.s32 1, %s4
  %s7 = scalar_select 0, %s6, %s4
  $region1: #{tpu_custom_call.1} parent=0
    #allocation2 [shape = 'u8[1024]{0}', space=vmem, size = 0x400, scoped, tag = 'output window, operand 0, single buffered']
    #allocation3 [shape = 's32[1]{0}', space=sflag, size = 0x4, scoped, tag = 'scoped memory for tpu_custom_call.1']
    %8 = vsyncpa [#allocation3], 0
    // Predicated region
    $region2: #{tpu_custom_call.1} parent=1 // pred_check
      _
    $region3: #{tpu_custom_call.1} parent=1 // pred_check_branch
      %10 = sbr.rel (0) target = $region5
    $region4: #{tpu_custom_call.1} parent=1 // pred_region
      _
    $region5: #{tpu_custom_call.1} parent=1 // pred_fallthru
      _
    // Predicated region
    $region6: #{tpu_custom_call.1} parent=1 // pred_check
      _
    $region7: #{tpu_custom_call.1} parent=1 // pred_check_branch
      %12 = sbr.rel (0) target = $region9
    $region8: #{tpu_custom_call.1} parent=1 // pred_region
      _
    $region9: #{tpu_custom_call.1} parent=1 // pred_fallthru
      _
    // Predicated region
    $region10: #{tpu_custom_call.1} parent=1 // pred_check
      _
    $region11: #{tpu_custom_call.1} parent=1 // pred_check_branch
      %14 = sbr.rel (0) target = $region13
    $region12: #{tpu_custom_call.1} parent=1 // pred_region
      _
    $region13: #{tpu_custom_call.1} parent=1 // pred_fallthru
      _
    %v15 = vld [vmem:[%s0] sm:$0xf]
    %v16 = vld [vmem:[%s1] sm:$0xff]
    %v17 = vld [vmem:[%s1 + $0x8] sm:$0xff]
    %v18 = vld [vmem:[%s1 + $0x10] sm:$0xff]
    %v19 = vld [vmem:[%s1 + $0x18] sm:$0xff]
    %v20 = vld [vmem:[%s1 + $0x20] sm:$0xff]
    %v21 = vld [vmem:[%s1 + $0x28] sm:$0xff]
    %v22 = vld [vmem:[%s1 + $0x30] sm:$0xff]
    %v23 = vld [vmem:[%s1 + $0x38] sm:$0xff]
    %v24 = vld [vmem:[%s1 + $0x40] sm:$0xff]
    %v25 = vld [vmem:[%s1 + $0x48] sm:$0xff]
    %v26 = vld [vmem:[%s1 + $0x50] sm:$0xff]
    %v27 = vld [vmem:[%s1 + $0x58] sm:$0xff]
    %v28 = vld [vmem:[%s1 + $0x60] sm:$0xff]
    %v29 = vld [vmem:[%s1 + $0x68] sm:$0xff]
    %v30 = vld [vmem:[%s1 + $0x70] sm:$0xff]
    %v31 = vld [vmem:[%s1 + $0x78] sm:$0xff]
    %v32 = vld [vmem:[%s1 + $0x80] sm:$0xff]
    %v33 = vld [vmem:[%s1 + $0x88] sm:$0xff]
    %v34 = vld [vmem:[%s1 + $0x90] sm:$0xff]
    %v35 = vld [vmem:[%s1 + $0x98] sm:$0xff]
    %v36 = vld [vmem:[%s1 + $0xa0] sm:$0xff]
    %v37 = vld [vmem:[%s1 + $0xa8] sm:$0xff]
    %v38 = vld [vmem:[%s1 + $0xb0] sm:$0xff]
    %v39 = vld [vmem:[%s1 + $0xb8] sm:$0xff]
    %v40 = vld [vmem:[%s1 + $0xc0] sm:$0xff]
    %v41 = vld [vmem:[%s1 + $0xc8] sm:$0xff]
    %v42 = vld [vmem:[%s1 + $0xd0] sm:$0xff]
    %v43 = vld [vmem:[%s1 + $0xd8] sm:$0xff]
    %v44 = vld [vmem:[%s1 + $0xe0] sm:$0xff]
    %v45 = vld [vmem:[%s1 + $0xe8] sm:$0xff]
    %v46 = vld [vmem:[%s1 + $0xf0] sm:$0xff]
    %v47 = vld [vmem:[%s1 + $0xf8] sm:$0xff]
    %v48 = vld [vmem:[%s2] sm:$0x1]
    %v50 = vlaneseq
    %v51 = vshrl.u32 %v50, 7
    %v52 = vsub.s32 0, %v51
    %v53 = vrot.slane %v48, %v52
    %v57 = vunpack.c.l.s4 1983009808
    %v58 = vunpack.c.0.s8 %v57
    %v59 = vlaneseq
    %v60 = vshrl.u32 %v59, 7
    %v61 = vsub.s32 %v58, %v60
    %v62 = vrot.slane %v15, %v61
    %v63 = vcombine.high %v62, %v62
    %66 = vmatprep.subr.mxu0 0.0
    %67 = vmatpush1.msra.mxu0 %v31
    %68 = vmatprep.subr.mxu0 0.0
    %69 = vmatpush1.msra.mxu0 %v30
    %70 = vmatprep.subr.mxu0 0.0
    %71 = vmatpush1.msra.mxu0 %v29
    %72 = vmatprep.subr.mxu0 0.0
    %73 = vmatpush1.msra.mxu0 %v28
    %74 = vmatprep.subr.mxu0 0.0
    %75 = vmatpush1.msra.mxu0 %v27
    %76 = vmatprep.subr.mxu0 0.0
    %77 = vmatpush1.msra.mxu0 %v26
    %78 = vmatprep.subr.mxu0 0.0
    %79 = vmatpush1.msra.mxu0 %v25
    %80 = vmatprep.subr.mxu0 0.0
    %81 = vmatpush1.msra.mxu0 %v24
    %82 = vmatprep.subr.mxu0 0.0
    %83 = vmatpush1.msra.mxu0 %v23
    %84 = vmatprep.subr.mxu0 0.0
    %85 = vmatpush1.msra.mxu0 %v22
    %86 = vmatprep.subr.mxu0 0.0
    %87 = vmatpush1.msra.mxu0 %v21
    %88 = vmatprep.subr.mxu0 0.0
    %89 = vmatpush1.msra.mxu0 %v20
    %90 = vmatprep.subr.mxu0 0.0
    %91 = vmatpush1.msra.mxu0 %v19
    %92 = vmatprep.subr.mxu0 0.0
    %93 = vmatpush1.msra.mxu0 %v18
    %94 = vmatprep.subr.mxu0 0.0
    %95 = vmatpush1.msra.mxu0 %v17
    %96 = vmatprep.subr.mxu0 0.0
    %97 = vmatpush1.msra.mxu0 %v16
    %98 = vmatprep.subr.mxu0 0.0
    %99 = vmatpush2.msra.mxu0 %v47
    %100 = vmatprep.subr.mxu0 0.0
    %101 = vmatpush2.msra.mxu0 %v46
    %102 = vmatprep.subr.mxu0 0.0
    %103 = vmatpush2.msra.mxu0 %v45
    %104 = vmatprep.subr.mxu0 0.0
    %105 = vmatpush2.msra.mxu0 %v44
    %106 = vmatprep.subr.mxu0 0.0
    %107 = vmatpush2.msra.mxu0 %v43
    %108 = vmatprep.subr.mxu0 0.0
    %109 = vmatpush2.msra.mxu0 %v42
    %110 = vmatprep.subr.mxu0 0.0
    %111 = vmatpush2.msra.mxu0 %v41
    %112 = vmatprep.subr.mxu0 0.0
    %113 = vmatpush2.msra.mxu0 %v40
    %114 = vmatprep.subr.mxu0 0.0
    %115 = vmatpush2.msra.mxu0 %v39
    %116 = vmatprep.subr.mxu0 0.0
    %117 = vmatpush2.msra.mxu0 %v38
    %118 = vmatprep.subr.mxu0 0.0
    %119 = vmatpush2.msra.mxu0 %v37
    %120 = vmatprep.subr.mxu0 0.0
    %121 = vmatpush2.msra.mxu0 %v36
    %122 = vmatprep.subr.mxu0 0.0
    %123 = vmatpush2.msra.mxu0 %v35
    %124 = vmatprep.subr.mxu0 0.0
    %125 = vmatpush2.msra.mxu0 %v34
    %126 = vmatprep.subr.mxu0 0.0
    %127 = vmatpush2.msra.mxu0 %v33
    %128 = vmatprep.subr.mxu0 0.0
    %129 = vmatpush2.msra.mxu0 %v32
    %130 = vmatprep.mubr.f32.mxu0 %v63
    %131 = vmatmul.mubr.f32.gmra.mxu0 %v62
    %v132 = vpop.f32.mrf.mxu0
    %v133 = vadd.f32 %v53, %v132
    %v134 = vpop.f32.mrf.mxu0
    %135 = vdwg.mxu0
    %vm136 = vcmask 74752
    %v137 = vsel %vm136, %v133, -inf
    %138 = vmax.xlane.f32.xlu0 %v137
    %v139 = vpop.xlane.xlu0 %138
    %v140 = vsub.f32 %v133, %v139
    %v141 = vmul.f32 %v140, 1.442695
    %v142 = vpow.pop %v141
    %v143 = vsel %vm136, %v142, 0.0
    %144 = vadd.xlane.f32.xlu0 %v143
    %v145 = vpop.xlane.xlu0 %144
    %v146 = vrcp.pop %v145
    %v147 = vmul.f32 %v142, %v146
    %148 = vst.msk [vmem:[#allocation2] sm:$0x3] %vm136, %v147
    // Predicated region
    $region14: #{tpu_custom_call.1} parent=1 // pred_check
      _
    $region15: #{tpu_custom_call.1} parent=1 // pred_check_branch
      %150 = sbr.rel (0) target = $region17
    $region16: #{tpu_custom_call.1} parent=1 // pred_region
      %s152 = ssub.s32 32, 32
      %153 = vsyncadd [#allocation3], %s152
      %s155 = sshll.u32 [#allocation2], 4
      %s156 = int_to_ptr.vmem [resolvable:$true] %s155
      %158 = dma.vmem_to_hbm [thread:$0]  %s156, 32, %s3, [#allocation3]
    $region17: #{tpu_custom_call.1} parent=1 // pred_fallthru
      _
    // Predicated region
    $region18: #{tpu_custom_call.1} parent=1 // pred_check
      _
    $region19: #{tpu_custom_call.1} parent=1 // pred_check_branch
      %160 = sbr.rel (0) target = $region21
    $region20: #{tpu_custom_call.1} parent=1 // pred_region
      %161 = dma.done [#allocation3], 32
    $region21: #{tpu_custom_call.1} parent=1 // pred_fallthru
      _
    %162 = vsyncpa [#allocation3], 1

</llo_original>
